<compile_context>
chip_gen: v5e
topology: v5e:2x2
jax: 0.10.0
libtpu: 0.0.40
codegen_flags: <defaults>
</compile_context>

<pallas_src>
import functools

import jax
import jax.numpy as jnp
from jax.experimental import pallas as pl
from jax.experimental.pallas import tpu as pltpu

_NEG_FILL = -1e30  # fill for padded vocab columns: exp underflows to exactly 0


def _round_up(x, m):
    return ((x + m - 1) // m) * m


def _vmem_limit_bytes():
    """Generation-aware scoped-VMEM limit (~3/4 of physical, capped at 96 MiB)."""
    phys = 128 * 1024 * 1024
    try:
        info = pltpu.get_tpu_info()
        cap = getattr(info, "vmem_capacity_bytes", None)
        if cap:
            phys = int(cap)
    except Exception:  # defensive: emulator / unknown backend
        pass
    return int(min(phys * 3 // 4, 96 * 1024 * 1024))


def _choose_tiles(n, v, max_tile_elems, block_v):
    """Pick (TN, TV) row/vocab tile sizes under the per-step VMEM element budget."""
    if block_v is not None:
        tv = v if block_v >= v else max(128, (block_v // 128) * 128)
    else:
        rows_full_v = max_tile_elems // max(v, 1)
        if rows_full_v >= 64 or v <= 4096:
            tv = v  # whole vocab per tile (single V step)
        else:
            # Tile the vocab so row tiles stay >= ~128 rows (online-LSE path).
            tv = max(128, ((max_tile_elems // 128) // 128) * 128)
            tv = min(tv, _round_up(v, 128))
            if tv >= v:
                tv = v
    rows_fit = max(8, (max_tile_elems // max(tv, 1)) // 8 * 8)
    rows_cap = max(8, _round_up(-(-n // 4), 8))  # keep >= ~4 grid steps along N
    tn = max(8, min(rows_fit, rows_cap))
    return tn, tv


def _ce_online_kernel(logits_ref, labels_ref, out_ref, m_sc, l_sc, p_sc, *, pad_token):
    """Online-LSE cross-entropy over one (TN, TV) logits tile.

    Grid is (N tiles, V tiles); V is the innermost ("arbitrary") axis. Scratch keeps
    per-row running max / sum-exp / target-logit; the (8,128) partial output tile
    (loss_sum, valid_count) is written only on the last V step of each row tile.
    """
    vi = pl.program_id(1)

    @pl.when(vi == 0)
    def _():
        m_sc[...] = jnp.full(m_sc.shape, -jnp.inf, m_sc.dtype)
        l_sc[...] = jnp.zeros(l_sc.shape, l_sc.dtype)
        p_sc[...] = jnp.zeros(p_sc.shape, p_sc.dtype)

    logits = logits_ref[...]          # (TN, TV) native dtype (bf16 stays packed)
    labels = labels_ref[...]          # (TN, 1) int32
    tn, tv = logits.shape

    # Target-logit gather: compare/select on the *native* dtype; at most one hit per
    # row (padded -1e30 columns can never match a label), so the sum is exact.
    # NOTE: non-pad labels outside [0, V) silently pick 0 (loss = LSE) instead of
    # raising like PyTorch.
    col = jax.lax.broadcasted_iota(jnp.int32, (tn, tv), 1) + vi * tv
    onehot = col == labels
    picked = jnp.sum(jnp.where(onehot, logits, jnp.zeros_like(logits)),
                     axis=1, keepdims=True).astype(jnp.float32)
    p_sc[...] += picked

    # Online log-sum-exp: max reduce on native dtype; exp and accumulation in f32.
    tile_max = jnp.max(logits, axis=1, keepdims=True).astype(jnp.float32)
    m_old = m_sc[...]
    m_new = jnp.maximum(m_old, tile_max)
    alpha = jnp.exp(m_old - m_new)    # 0 on the first V step (m_old = -inf)
    sum_exp = jnp.sum(jnp.exp(logits.astype(jnp.float32) - m_new), axis=1, keepdims=True)
    l_sc[...] = alpha * l_sc[...] + sum_exp
    m_sc[...] = m_new

    @pl.when(vi == pl.num_programs(1) - 1)
    def _():
        nll = m_sc[...] + jnp.log(l_sc[...]) - p_sc[...]   # (TN, 1) = LSE - target logit
        valid = labels != pad_token                        # ignore_index handling
        loss_sum = jnp.sum(jnp.where(valid, nll, 0.0))
        valid_count = jnp.sum(valid.astype(jnp.float32))
        # Pack partials into a lane/sublane-aligned (8,128) tile:
        #   [0, 0] = loss_sum, [1, 0] = valid_count.
        r = jax.lax.broadcasted_iota(jnp.int32, (8, 128), 0)
        c = jax.lax.broadcasted_iota(jnp.int32, (8, 128), 1)
        out_ref[0, :, :] = (jnp.where((r == 0) & (c == 0), loss_sum, 0.0)
                            + jnp.where((r == 1) & (c == 0), valid_count, 0.0))


def token_traj_waypoint_loss(pred_vocab, labels, *, pad_token, block_v=None):
    """JAX wrapper matching TokenTrajWayPointLoss.forward(pred_vocab, labels).

    pred_vocab: (N, V) float logits (callers flatten extra dims into N, matching
                PyTorch (N, C, d1, ...) semantics). Streamed HBM->VMEM in native
                dtype (bf16-friendly); compute is f32.
    labels:     (N,) integer class ids; entries equal to pad_token are ignored.
    block_v:    optional vocab-tile override (multiple of 128) -- mainly for tests;
                by default V is only tiled when a full-vocab row tile would not fit.
    Returns a scalar float32 loss (NaN if every label is pad_token, like PyTorch).
    """
    n, v = pred_vocab.shape
    labels2d = labels.astype(jnp.int32).reshape(n, 1)

    # Per-step VMEM footprint: 2x double-buffered native-dtype input tile plus
    # ~3 live (TN, TV) f32 temps in the kernel => ~(2*itemsize + 12) bytes/element.
    vmem_limit = _vmem_limit_bytes()
    itemsize = jnp.dtype(pred_vocab.dtype).itemsize
    max_tile_elems = max(8 * 128, (vmem_limit // 2) // (2 * itemsize + 12))

    tn, tv = _choose_tiles(n, v, max_tile_elems, block_v)

    n_pad = _round_up(n, tn)
    v_pad = _round_up(v, tv)
    grid_n = n_pad // tn
    grid_v = v_pad // tv

    # Padded vocab columns get a huge negative logit (exp -> 0, never match a label);
    # padded rows get pad_token labels so the valid mask drops them.
    if n_pad != n or v_pad != v:
        pred_vocab = jnp.pad(pred_vocab, ((0, n_pad - n), (0, v_pad - v)),
                             constant_values=_NEG_FILL)
    if n_pad != n:
        labels2d = jnp.pad(labels2d, ((0, n_pad - n), (0, 0)), constant_values=pad_token)

    kernel = functools.partial(_ce_online_kernel, pad_token=pad_token)
    partials = pl.pallas_call(
        kernel,
        out_shape=jax.ShapeDtypeStruct((grid_n, 8, 128), jnp.float32),
        grid_spec=pltpu.PrefetchScalarGridSpec(
            num_scalar_prefetch=0,
            grid=(grid_n, grid_v),
            in_specs=[
                pl.BlockSpec((tn, tv), lambda ni, vi: (ni, vi)),  # logits, native dtype
                pl.BlockSpec((tn, 1), lambda ni, vi: (ni, 0)),    # labels
            ],
            out_specs=pl.BlockSpec((1, 8, 128), lambda ni, vi: (ni, 0, 0)),
            scratch_shapes=[
                pltpu.VMEM((tn, 1), jnp.float32),   # running row max
                pltpu.VMEM((tn, 1), jnp.float32),   # running sum-exp
                pltpu.VMEM((tn, 1), jnp.float32),   # target logit
            ],
        ),
        compiler_params=pltpu.CompilerParams(
            dimension_semantics=("parallel", "arbitrary"),  # shard N tiles across TCs
            vmem_limit_bytes=vmem_limit,
        ),
    )(pred_vocab, labels2d)

    total_loss = jnp.sum(partials[:, 0, 0])
    total_count = jnp.sum(partials[:, 1, 0])
    return total_loss / total_count


def _reference_loss(pred_vocab, labels, pad_token):
    """Pure-JAX reference matching torch.nn.CrossEntropyLoss(ignore_index=pad_token)."""
    logits = pred_vocab.astype(jnp.float32)
    logp = jax.nn.log_softmax(logits, axis=-1)
    nll = -jnp.take_along_axis(logp, labels.astype(jnp.int32)[:, None], axis=-1)[:, 0]
    valid = labels != pad_token
    return jnp.sum(jnp.where(valid, nll, 0.0)) / jnp.sum(valid.astype(jnp.float32))


if __name__ == "__main__":
    PAD_TOKEN = 0

    def run_case(n, v, dtype, block_v, tol):
        key = jax.random.PRNGKey(0)
        k_logits, k_labels = jax.random.split(key)
        pred_vocab = jax.random.normal(k_logits, (n, v), dtype=jnp.float32).astype(dtype)
        labels = jax.random.randint(k_labels, (n,), 0, v, dtype=jnp.int32)
        labels = labels.at[::5].set(PAD_TOKEN)          # exercise ignore_index path
        loss = jax.block_until_ready(
            token_traj_waypoint_loss(pred_vocab, labels, pad_token=PAD_TOKEN,
                                     block_v=block_v))
        ref = jax.block_until_ready(_reference_loss(pred_vocab, labels, PAD_TOKEN))
        assert jnp.allclose(loss, ref, atol=tol, rtol=tol), (n, v, str(dtype), block_v, loss, ref)

    # batch=2, seq=8 -> N=16 flattened tokens, vocab=128 (full-vocab tile path).
    run_case(2 * 8, 128, jnp.float32, None, 1e-5)
    # Force vocab tiling (grid_v=3) to exercise the online-LSE accumulator path.
    run_case(24, 384, jnp.float32, 128, 1e-5)
    # bf16 logits streamed in native dtype; compute stays f32.
    run_case(2 * 8, 256, jnp.bfloat16, None, 1e-3)

    print("KERNEL_OK")
</pallas_src>

<mosaic_0001>
module attributes {stable_mosaic.version = 11 : i64} {
  func.func @_ce_online_kernel(%arg0: i32, %arg1: i32, %arg2: memref<8x128xf32, #tpu.memory_space<vmem>>, %arg3: memref<8x1xi32, #tpu.memory_space<vmem>>, %arg4: memref<1x8x128xf32, #tpu.memory_space<vmem>>, %arg5: memref<8x1xf32, #tpu.memory_space<vmem>>, %arg6: memref<8x1xf32, #tpu.memory_space<vmem>>, %arg7: memref<8x1xf32, #tpu.memory_space<vmem>>) attributes {dimension_semantics = [#tpu.dimension_semantics<parallel>, #tpu.dimension_semantics<arbitrary>], iteration_bounds = array<i64: 2, 1>, scalar_prefetch = 0 : i64, scratch_operands = 3 : i64, tpu.core_type = #tpu.core_type<tc>, window_params = [{transform_indices = @transform_0, window_bounds = array<i64: 8, 128>}, {transform_indices = @transform_1, window_bounds = array<i64: 8, 1>}, {transform_indices = @transform_2, window_bounds = array<i64: 1, 8, 128>}]} {
    %c0_i32 = arith.constant 0 : i32
    %0 = arith.cmpi eq, %arg1, %c0_i32 : i32
    %1 = arith.extui %0 : i1 to i32
    %c0_i32_0 = arith.constant 0 : i32
    %2 = arith.cmpi ne, %1, %c0_i32_0 : i32
    scf.if %2 {
      %cst_21 = arith.constant 0xFF800000 : f32
      %37 = vector.broadcast %cst_21 : f32 to vector<8x1xf32>
      %c0_22 = arith.constant 0 : index
      %c0_23 = arith.constant 0 : index
      %38 = vector.load %arg5[%c0_22, %c0_23] : memref<8x1xf32, #tpu.memory_space<vmem>>, vector<8x1xf32>
      tpu.vector_store %arg5[%c0_22, %c0_23], %37 {strides = array<i32>} : memref<8x1xf32, #tpu.memory_space<vmem>>, vector<8x1xf32>,
      %cst_24 = arith.constant 0.000000e+00 : f32
      %39 = vector.broadcast %cst_24 : f32 to vector<8x1xf32>
      %c0_25 = arith.constant 0 : index
      %c0_26 = arith.constant 0 : index
      %40 = vector.load %arg6[%c0_25, %c0_26] : memref<8x1xf32, #tpu.memory_space<vmem>>, vector<8x1xf32>
      tpu.vector_store %arg6[%c0_25, %c0_26], %39 {strides = array<i32>} : memref<8x1xf32, #tpu.memory_space<vmem>>, vector<8x1xf32>,
      %cst_27 = arith.constant 0.000000e+00 : f32
      %41 = vector.broadcast %cst_27 : f32 to vector<8x1xf32>
      %c0_28 = arith.constant 0 : index
      %c0_29 = arith.constant 0 : index
      %42 = vector.load %arg7[%c0_28, %c0_29] : memref<8x1xf32, #tpu.memory_space<vmem>>, vector<8x1xf32>
      tpu.vector_store %arg7[%c0_28, %c0_29], %41 {strides = array<i32>} : memref<8x1xf32, #tpu.memory_space<vmem>>, vector<8x1xf32>,
    } else {
    }
    %c0 = arith.constant 0 : index
    %c0_1 = arith.constant 0 : index
    %3 = vector.load %arg2[%c0, %c0_1] : memref<8x128xf32, #tpu.memory_space<vmem>>, vector<8x128xf32>
    %c0_2 = arith.constant 0 : index
    %c0_3 = arith.constant 0 : index
    %4 = vector.load %arg3[%c0_2, %c0_3] : memref<8x1xi32, #tpu.memory_space<vmem>>, vector<8x1xi32>
    %5 = tpu.iota {dimensions = array<i32: 1>} : vector<8x128xi32>
    %c128_i32 = arith.constant 128 : i32
    %6 = arith.muli %arg1, %c128_i32 : i32
    %7 = vector.broadcast %6 : i32 to vector<8x128xi32>
    %8 = arith.addi %5, %7 : vector<8x128xi32>
    %9 = vector.broadcast %4 : vector<8x1xi32> to vector<8x128xi32>
    %10 = arith.cmpi eq, %8, %9 : vector<8x128xi32>
    %cst = arith.constant 0.000000e+00 : f32
    %11 = vector.broadcast %cst : f32 to vector<8x128xf32>
    %12 = arith.select %10, %3, %11 : vector<8x128xi1>, vector<8x128xf32>
    %cst_4 = arith.constant dense<0.000000e+00> : vector<8xf32>
    %13 = vector.multi_reduction <add>, %12, %cst_4 [1] : vector<8x128xf32> to vector<8xf32>
    %14 = vector.shape_cast %13 : vector<8xf32> to vector<8x1xf32>
    %c0_5 = arith.constant 0 : index
    %c0_6 = arith.constant 0 : index
    %15 = vector.load %arg7[%c0_5, %c0_6] : memref<8x1xf32, #tpu.memory_space<vmem>>, vector<8x1xf32>
    %16 = arith.addf %15, %14 : vector<8x1xf32>
    %c0_7 = arith.constant 0 : index
    %c0_8 = arith.constant 0 : index
    %17 = vector.load %arg7[%c0_7, %c0_8] : memref<8x1xf32, #tpu.memory_space<vmem>>, vector<8x1xf32>
    tpu.vector_store %arg7[%c0_7, %c0_8], %16 {strides = array<i32>} : memref<8x1xf32, #tpu.memory_space<vmem>>, vector<8x1xf32>,
    %cst_9 = arith.constant dense<0xFF800000> : vector<8xf32>
    %18 = vector.multi_reduction <maximumf>, %3, %cst_9 [1] : vector<8x128xf32> to vector<8xf32>
    %19 = vector.shape_cast %18 : vector<8xf32> to vector<8x1xf32>
    %c0_10 = arith.constant 0 : index
    %c0_11 = arith.constant 0 : index
    %20 = vector.load %arg5[%c0_10, %c0_11] : memref<8x1xf32, #tpu.memory_space<vmem>>, vector<8x1xf32>
    %21 = arith.maximumf %20, %19 : vector<8x1xf32>
    %22 = arith.subf %20, %21 : vector<8x1xf32>
    %23 = math.exp %22 : vector<8x1xf32>
    %24 = vector.broadcast %21 : vector<8x1xf32> to vector<8x128xf32>
    %25 = arith.subf %3, %24 : vector<8x128xf32>
    %26 = math.exp %25 : vector<8x128xf32>
    %cst_12 = arith.constant dense<0.000000e+00> : vector<8xf32>
    %27 = vector.multi_reduction <add>, %26, %cst_12 [1] : vector<8x128xf32> to vector<8xf32>
    %28 = vector.shape_cast %27 : vector<8xf32> to vector<8x1xf32>
    %c0_13 = arith.constant 0 : index
    %c0_14 = arith.constant 0 : index
    %29 = vector.load %arg6[%c0_13, %c0_14] : memref<8x1xf32, #tpu.memory_space<vmem>>, vector<8x1xf32>
    %30 = arith.mulf %23, %29 : vector<8x1xf32>
    %31 = arith.addf %30, %28 : vector<8x1xf32>
    %c0_15 = arith.constant 0 : index
    %c0_16 = arith.constant 0 : index
    %32 = vector.load %arg6[%c0_15, %c0_16] : memref<8x1xf32, #tpu.memory_space<vmem>>, vector<8x1xf32>
    tpu.vector_store %arg6[%c0_15, %c0_16], %31 {strides = array<i32>} : memref<8x1xf32, #tpu.memory_space<vmem>>, vector<8x1xf32>,
    %c0_17 = arith.constant 0 : index
    %c0_18 = arith.constant 0 : index
    %33 = vector.load %arg5[%c0_17, %c0_18] : memref<8x1xf32, #tpu.memory_space<vmem>>, vector<8x1xf32>
    tpu.vector_store %arg5[%c0_17, %c0_18], %21 {strides = array<i32>} : memref<8x1xf32, #tpu.memory_space<vmem>>, vector<8x1xf32>,
    %c0_i32_19 = arith.constant 0 : i32
    %34 = arith.cmpi eq, %arg1, %c0_i32_19 : i32
    %35 = arith.extui %34 : i1 to i32
    %c0_i32_20 = arith.constant 0 : i32
    %36 = arith.cmpi ne, %35, %c0_i32_20 : i32
    scf.if %36 {
      %c0_21 = arith.constant 0 : index
      %c0_22 = arith.constant 0 : index
      %37 = vector.load %arg5[%c0_21, %c0_22] : memref<8x1xf32, #tpu.memory_space<vmem>>, vector<8x1xf32>
      %c0_23 = arith.constant 0 : index
      %c0_24 = arith.constant 0 : index
      %38 = vector.load %arg6[%c0_23, %c0_24] : memref<8x1xf32, #tpu.memory_space<vmem>>, vector<8x1xf32>
      %39 = math.log %38 : vector<8x1xf32>
      %40 = arith.addf %37, %39 : vector<8x1xf32>
      %c0_25 = arith.constant 0 : index
      %c0_26 = arith.constant 0 : index
      %41 = vector.load %arg7[%c0_25, %c0_26] : memref<8x1xf32, #tpu.memory_space<vmem>>, vector<8x1xf32>
      %42 = arith.subf %40, %41 : vector<8x1xf32>
      %c0_i32_27 = arith.constant 0 : i32
      %43 = vector.broadcast %c0_i32_27 : i32 to vector<8x1xi32>
      %44 = arith.cmpi ne, %4, %43 : vector<8x1xi32>
      %cst_28 = arith.constant 0.000000e+00 : f32
      %45 = vector.broadcast %cst_28 : f32 to vector<8x1xf32>
      %46 = arith.select %44, %42, %45 : vector<8x1xi1>, vector<8x1xf32>
      %47 = vector.shape_cast %46 : vector<8x1xf32> to vector<1x8x1xf32>
      %cst_29 = arith.constant dense<0.000000e+00> : vector<1xf32>
      %48 = vector.multi_reduction <add>, %47, %cst_29 [1, 2] : vector<1x8x1xf32> to vector<1xf32>
      %49 = vector.shape_cast %48 : vector<1xf32> to vector<1x1x1xf32>
      %50 = vector.extract %49[0, 0, 0] : f32 from vector<1x1x1xf32>
      %51 = arith.extui %44 : vector<8x1xi1> to vector<8x1xi32>
      %52 = arith.sitofp %51 : vector<8x1xi32> to vector<8x1xf32>
      %53 = vector.shape_cast %52 : vector<8x1xf32> to vector<1x8x1xf32>
      %cst_30 = arith.constant dense<0.000000e+00> : vector<1xf32>
      %54 = vector.multi_reduction <add>, %53, %cst_30 [1, 2] : vector<1x8x1xf32> to vector<1xf32>
      %55 = vector.shape_cast %54 : vector<1xf32> to vector<1x1x1xf32>
      %56 = vector.extract %55[0, 0, 0] : f32 from vector<1x1x1xf32>
      %57 = tpu.iota {dimensions = array<i32: 0>} : vector<8x128xi32>
      %58 = tpu.iota {dimensions = array<i32: 1>} : vector<8x128xi32>
      %c0_i32_31 = arith.constant 0 : i32
      %59 = vector.broadcast %c0_i32_31 : i32 to vector<8x128xi32>
      %60 = arith.cmpi eq, %57, %59 : vector<8x128xi32>
      %c0_i32_32 = arith.constant 0 : i32
      %61 = vector.broadcast %c0_i32_32 : i32 to vector<8x128xi32>
      %62 = arith.cmpi eq, %58, %61 : vector<8x128xi32>
      %63 = arith.andi %60, %62 : vector<8x128xi1>
      %cst_33 = arith.constant 0.000000e+00 : f32
      %64 = vector.broadcast %50 : f32 to vector<8x128xf32>
      %65 = vector.broadcast %cst_33 : f32 to vector<8x128xf32>
      %66 = arith.select %63, %64, %65 : vector<8x128xi1>, vector<8x128xf32>
      %c1_i32 = arith.constant 1 : i32
      %67 = vector.broadcast %c1_i32 : i32 to vector<8x128xi32>
      %68 = arith.cmpi eq, %57, %67 : vector<8x128xi32>
      %c0_i32_34 = arith.constant 0 : i32
      %69 = vector.broadcast %c0_i32_34 : i32 to vector<8x128xi32>
      %70 = arith.cmpi eq, %58, %69 : vector<8x128xi32>
      %71 = arith.andi %68, %70 : vector<8x128xi1>
      %cst_35 = arith.constant 0.000000e+00 : f32
      %72 = vector.broadcast %56 : f32 to vector<8x128xf32>
      %73 = vector.broadcast %cst_35 : f32 to vector<8x128xf32>
      %74 = arith.select %71, %72, %73 : vector<8x128xi1>, vector<8x128xf32>
      %75 = arith.addf %66, %74 : vector<8x128xf32>
      %c0_36 = arith.constant 0 : index
      %c0_37 = arith.constant 0 : index
      %c0_38 = arith.constant 0 : index
      %76 = vector.load %arg4[%c0_36, %c0_37, %c0_38] : memref<1x8x128xf32, #tpu.memory_space<vmem>>, vector<1x8x128xf32>
      %77 = vector.shape_cast %76 : vector<1x8x128xf32> to vector<8x128xf32>
      %78 = vector.shape_cast %75 : vector<8x128xf32> to vector<1x8x128xf32>
      tpu.vector_store %arg4[%c0_36, %c0_37, %c0_38], %78 {strides = array<i32>} : memref<1x8x128xf32, #tpu.memory_space<vmem>>, vector<1x8x128xf32>,
    } else {
    }
    return
  }
  func.func @transform_0(%arg0: i32, %arg1: i32) -> (i32, i32) {
    %c0_i32 = arith.constant 0 : i32
    return %arg0, %arg1 : i32, i32
  }
  func.func @transform_1(%arg0: i32, %arg1: i32) -> (i32, i32) {
    %c0_i32 = arith.constant 0 : i32
    %c0_i32_0 = arith.constant 0 : i32
    return %arg0, %c0_i32 : i32, i32
  }
  func.func @transform_2(%arg0: i32, %arg1: i32) -> (i32, i32, i32) {
    %c0_i32 = arith.constant 0 : i32
    %c0_i32_0 = arith.constant 0 : i32
    %c0_i32_1 = arith.constant 0 : i32
    return %arg0, %c0_i32, %c0_i32_0 : i32, i32, i32
  }
}

</mosaic_0001>

<llo_original>
// kernel: tpu_custom_call.1
$region0: #{tpu_custom_call.1}
  #allocation0 [shape = 'u32[]', space=smem, size = 0x4, offset = 0x4, fixed_abs, tag = 'smem constant byte address 0x4 - core index']
  #allocation1 [shape = 'u32[72,128]{1,0:T(1,128)}', space=vmem, size = 0x9000, scoped, tag = 'internal scratch']
  #allocation2 [shape = 'f32[8,1]{1,0:T(8,128)}', space=vmem, size = 0x1000, scoped, tag = 'scratch operand']
  #allocation3 [shape = 'f32[8,1]{1,0:T(8,128)}', space=vmem, size = 0x1000, scoped, tag = 'scratch operand']
  #allocation4 [shape = 'f32[8,1]{1,0:T(8,128)}', space=vmem, size = 0x1000, scoped, tag = 'scratch operand']
  %s0 = inlined_call_operand.vmem [shape: f32[16,128], index: 0, kind: input, shape index: {}]
  %s1 = inlined_call_operand.vmem [shape: s32[16,1], index: 1, kind: input, shape index: {}]
  %s2 = inlined_call_operand.hbm [shape: f32[2,8,128], index: 2, kind: output, shape index: {}]
  %s3 = sld [smem:[#allocation0]]
  $region49: #{tpu_custom_call.1} parent=0
    _
  %s5 = ssub.s32 1, %s3
  %s6 = scalar_select 0, %s5, %s3
  $region1: #{tpu_custom_call.1} parent=0
    #allocation5 [shape = 'u8[8192]{0}', space=vmem, size = 0x2000, scoped, tag = 'output window, operand 0']
    #allocation6 [shape = 's32[2]{0}', space=sflag, size = 0x8, scoped, tag = 'scoped memory for tpu_custom_call.1']
    %7 = vsyncpa [#allocation6], 0
    %s8 = scalar_lea.sflag [#allocation6], 1
    %9 = vsyncpa %s8, 0
    loop: start=0, step=1, limit=4
    $region2: #{tpu_custom_call.1} parent=1 // loop_pre_header
      _
    $region3: #{tpu_custom_call.1} parent=1 // loop_header
      %s11 = sphi 0, %s15
      %p12 = scmp.ge.s32.totalorder %s11, 4
      %s18 = sphi 0, %s30
      %s19 = sphi 0, %s26
      %s20 = sphi 0, %s18
      %s21 = sphi 0, %s19
      %s22 = sphi 0, %s20
      %s23 = sphi 0, %s21
      %s35 = sphi 0, %s37
      %s38 = sphi 0, %s35
      %s39 = sphi 0, %s38
      %s55 = sphi 0, %s39
      %s61 = sphi 0, %s63
      %s64 = sphi 0, %s61
      %s65 = sphi 0, %s64
      %s81 = sphi 0, %s65
      %s87 = sphi 0, %s89
      %s90 = sphi 0, %s87
      %s91 = sphi 0, %s90
      %s107 = sphi 0, %s91
    $region4: #{tpu_custom_call.1} parent=1 // loop_header_branch
      %14 = sbr.rel (%p12) target = $region8
    $region5: #{tpu_custom_call.1} parent=1 // loop_body
      %s16 = ssub.s32 %s11, 1
      %s17 = ssub.s32 %s11, 2
      %s24 = sadd.s32 1, %s19
      %p25 = scmp.ge.s32.totalorder %s24, 1
      %s26 = scalar_select %p25, 0, %s24
      %s27 = sadd.s32 1, %s18
      %s28 = scalar_select %p25, %s27, %s18
      %p29 = scmp.ge.s32.totalorder %s28, 2
      %s30 = scalar_select %p29, 0, %s28
      %s31 = ssub.s32 %s18, %s30
      %s32 = ssub.s32 %s19, %s26
      %s33 = sor.u32 %s31, %s32
      %p34 = scmp.eq.s32.totalorder %s33, 0
      %s36 = sadd.s32 %s35, 1
      %s37 = scalar_select %p34, %s35, %s36
      %p40 = pneg %p34
      %p41 = scmp.eq.s32.totalorder %s11, 1
      %p42 = por %p40, %p41
      %p43 = scmp.ne.s32.totalorder %s35, %s38
      %p44 = scmp.eq.s32.totalorder %s11, 0
      %p45 = por %p43, %p44
      %p46 = scmp.ne.s32.totalorder %s35, %s38
      %p47 = scmp.eq.s32.totalorder %s16, 1
      %p48 = por %p46, %p47
      %p49 = scmp.ne.s32.totalorder %s38, %s39
      %p50 = scmp.eq.s32.totalorder %s16, 0
      %p51 = por %p49, %p50
      %p52 = scmp.ne.s32.totalorder %s38, %s39
      %p53 = scmp.eq.s32.totalorder %s17, 1
      %p54 = por %p52, %p53
      %p56 = scmp.ne.s32.totalorder %s39, %s55
      %p57 = scmp.eq.s32.totalorder %s17, 0
      %p58 = por %p56, %p57
      %s59 = ssub.s32 %s18, %s30
      %p60 = scmp.eq.s32.totalorder %s59, 0
      %s62 = sadd.s32 %s61, 1
      %s63 = scalar_select %p60, %s61, %s62
      %p66 = pneg %p60
      %p67 = scmp.eq.s32.totalorder %s11, 1
      %p68 = por %p66, %p67
      %p69 = scmp.ne.s32.totalorder %s61, %s64
      %p70 = scmp.eq.s32.totalorder %s11, 0
      %p71 = por %p69, %p70
      %p72 = scmp.ne.s32.totalorder %s61, %s64
      %p73 = scmp.eq.s32.totalorder %s16, 1
      %p74 = por %p72, %p73
      %p75 = scmp.ne.s32.totalorder %s64, %s65
      %p76 = scmp.eq.s32.totalorder %s16, 0
      %p77 = por %p75, %p76
      %p78 = scmp.ne.s32.totalorder %s64, %s65
      %p79 = scmp.eq.s32.totalorder %s17, 1
      %p80 = por %p78, %p79
      %p82 = scmp.ne.s32.totalorder %s65, %s81
      %p83 = scmp.eq.s32.totalorder %s17, 0
      %p84 = por %p82, %p83
      %s85 = ssub.s32 %s18, %s30
      %p86 = scmp.eq.s32.totalorder %s85, 0
      %s88 = sadd.s32 %s87, 1
      %s89 = scalar_select %p86, %s87, %s88
      %p92 = pneg %p86
      %p93 = scmp.eq.s32.totalorder %s11, 1
      %p94 = por %p92, %p93
      %p95 = scmp.ne.s32.totalorder %s87, %s90
      %p96 = scmp.eq.s32.totalorder %s11, 0
      %p97 = por %p95, %p96
      %p98 = scmp.ne.s32.totalorder %s87, %s90
      %p99 = scmp.eq.s32.totalorder %s16, 1
      %p100 = por %p98, %p99
      %p101 = scmp.ne.s32.totalorder %s90, %s91
      %p102 = scmp.eq.s32.totalorder %s16, 0
      %p103 = por %p101, %p102
      %p104 = scmp.ne.s32.totalorder %s90, %s91
      %p105 = scmp.eq.s32.totalorder %s17, 1
      %p106 = por %p104, %p105
      %p108 = scmp.ne.s32.totalorder %s91, %s107
      %p109 = scmp.eq.s32.totalorder %s17, 0
      %p110 = por %p108, %p109
      %p111 = scmp.le.s32.totalorder 1, %s11
      %p112 = scmp.lt.s32.totalorder %s11, 3
      %p113 = pnand %p111, %p112
      %p114 = pneg %p113
      // Predicated region
      $region9: #{tpu_custom_call.1} parent=5 // pred_check
        _
      $region10: #{tpu_custom_call.1} parent=5 // pred_check_branch
        %116 = sbr.rel (%p113) target = $region12
      $region11: #{tpu_custom_call.1} parent=5 // pred_region
        %s117 = ssub.s32 %s11, 1
      $region12: #{tpu_custom_call.1} parent=5 // pred_fallthru
        _
      %p118 = scmp.lt.s32.totalorder %s11, 2
      // Predicated region
      $region13: #{tpu_custom_call.1} parent=5 // pred_check
        %p119 = pneg %p118
      $region14: #{tpu_custom_call.1} parent=5 // pred_check_branch
        %121 = sbr.rel (%p119) target = $region16
      $region15: #{tpu_custom_call.1} parent=5 // pred_region
        // Predicated region
        $region17: #{tpu_custom_call.1} parent=15 // pred_check
          %p122 = pneg %p45
        $region18: #{tpu_custom_call.1} parent=15 // pred_check_branch
          %124 = sbr.rel (%p122) target = $region20
        $region19: #{tpu_custom_call.1} parent=15 // pred_region
          %p125 = scmp.lt.s32.totalorder %s18, 1
          %s126 = scalar_select %p125, %s18, 1
          %p127 = scmp.lt.s32.totalorder %s19, 0
          %s128 = scalar_select %p127, %s19, 0
          %s129 = sadd.s32 %s128, %s126
          %s130 = smul.addr %s129, 8
          %s131 = scalar_lea.vmem %s0, %s130
        $region20: #{tpu_custom_call.1} parent=15 // pred_fallthru
          _
        // Predicated region
        $region21: #{tpu_custom_call.1} parent=15 // pred_check
          %p132 = pneg %p71
        $region22: #{tpu_custom_call.1} parent=15 // pred_check_branch
          %134 = sbr.rel (%p132) target = $region24
        $region23: #{tpu_custom_call.1} parent=15 // pred_region
          %p135 = scmp.lt.s32.totalorder %s18, 1
          %s136 = scalar_select %p135, %s18, 1
          %s137 = smul.addr %s136, 8
          %s138 = scalar_lea.vmem %s1, %s137
        $region24: #{tpu_custom_call.1} parent=15 // pred_fallthru
          _
      $region16: #{tpu_custom_call.1} parent=5 // pred_fallthru
        _
      %p139 = scmp.le.s32.totalorder 1, %s11
      %p140 = scmp.lt.s32.totalorder %s11, 3
      %p141 = pnand %p139, %p140
      %p142 = pneg %p141
      // Predicated region
      $region25: #{tpu_custom_call.1} parent=5 // pred_check
        _
      $region26: #{tpu_custom_call.1} parent=5 // pred_check_branch
        %144 = sbr.rel (%p141) target = $region28
      $region27: #{tpu_custom_call.1} parent=5 // pred_region
        %s145 = ssub.s32 %s11, 1
        %p146 = scmp.lt.s32.totalorder %s20, 1
        %s147 = scalar_select %p146, %s20, 1
        %p148 = scmp.lt.s32.totalorder %s21, 0
        %s149 = scalar_select %p148, %s21, 0
        %s150 = sadd.s32 %s149, %s147
        %s151 = smul.addr %s150, 8
        %s152 = scalar_lea.vmem %s0, %s151
        %p153 = pneg %p51
        %p154 = pneg %p48
        %p155 = scmp.lt.s32.totalorder %s20, 1
        %s156 = scalar_select %p155, %s20, 1
        %s157 = smul.addr %s156, 8
        %s158 = scalar_lea.vmem %s1, %s157
        %p159 = pneg %p77
        %p160 = pneg %p74
        %p161 = pneg %p103
        %p162 = pneg %p100
        %s163 = sand.u32 %s90, 1
        %s164 = scalar_lea.sflag [#allocation6], %s163
        %s165 = sand.u32 %s90, 1
        %s166 = smul.addr %s165, 8
        %s167 = scalar_lea.vmem [#allocation5], %s166
        %p168 = scmp.lt.s32.totalorder %s20, 1
        %s169 = scalar_select %p168, %s20, 1
        %p170 = scmp.lt.s32.totalorder %s21, 0
        %s171 = scalar_select %p170, %s21, 0
        %s172 = sadd.s32 %s171, %s169
        %s173 = smul.addr %s172, 8
        %s174 = scalar_lea.vmem %s0, %s173
        %p175 = scmp.lt.s32.totalorder %s20, 1
        %s176 = scalar_select %p175, %s20, 1
        %s177 = smul.addr %s176, 8
        %s178 = scalar_lea.vmem %s1, %s177
        %p179 = scmp.eq.s32.totalorder %s21, 0
        // Predicated region
        $region29: #{tpu_custom_call.1} parent=27 // pred_check
          %p180 = pneg %p179
        $region30: #{tpu_custom_call.1} parent=27 // pred_check_branch
          %182 = sbr.rel (%p180) target = $region32
        $region31: #{tpu_custom_call.1} parent=27 // pred_region
          %vm183 = vcmask 7168
          %184 = vst.msk [vmem:[#allocation2] sm:$0xff] %vm183, -inf
          %185 = vst.msk [vmem:[#allocation3] sm:$0xff] %vm183, 0.0
          %186 = vst.msk [vmem:[#allocation4] sm:$0xff] %vm183, 0.0
        $region32: #{tpu_custom_call.1} parent=27 // pred_fallthru
          _
        %v187 = vld [vmem:[%s174] sm:$0xff]
        %v188 = vld [vmem:[%s178] sm:$0xff]
        %v189 = vlaneseq
        %v190 = vand.u32 %v189, 127
        %s191 = smul.u32 %s21, 128
        %v192 = vstv %s191
        %v193 = vadd.s32 %v190, %v192
        %194 = vset.pattern.permute.xlu0 0
        %195 = vperm.xlu0 %194, %v188
        %v196 = vpop.permute.xlu0 %195
        %vm197 = vcmp.eq.s32.totalorder %v193, %v196
        %v198 = vsel %vm197, %v187, 0.0
        %199 = vadd.xlane.f32.xlu0 %v198
        %v200 = vpop.xlane.xlu0 %199
        %v201 = vld [vmem:[#allocation4] sm:$0xff]
        %v202 = vadd.f32 %v201, %v200
        %vm203 = vcmask 7168
        %204 = vst.msk [vmem:[#allocation4] sm:$0xff] %vm203, %v202
        %205 = vmax.xlane.f32.xlu0 %v187
        %v206 = vpop.xlane.xlu0 %205
        %v207 = vld [vmem:[#allocation2] sm:$0xff]
        %v208 = vmax.f32 %v207, %v206
        %v209 = vsub.f32 %v207, %v208
        %v210 = vmul.f32 %v209, 1.442695
        %v211 = vpow.pop %v210
        %213 = vset.pattern.permute.xlu0 0
        %214 = vperm.xlu0 %213, %v208
        %v215 = vpop.permute.xlu0 %214
        %v217 = vsub.f32 %v187, %v215
        %v218 = vmul.f32 %v217, 1.442695
        %v219 = vpow.pop %v218
        %220 = vadd.xlane.f32.xlu0 %v219
        %v221 = vpop.xlane.xlu0 %220
        %v222 = vld [vmem:[#allocation3] sm:$0xff]
        %v223 = vmul.f32 %v211, %v222
        %v224 = vadd.f32 %v223, %v221
        %225 = vst.msk [vmem:[#allocation3] sm:$0xff] %vm203, %v224
        %226 = vst.msk [vmem:[#allocation2] sm:$0xff] %vm203, %v208
        // Predicated region
        $region33: #{tpu_custom_call.1} parent=27 // pred_check
          %p227 = pneg %p179
        $region34: #{tpu_custom_call.1} parent=27 // pred_check_branch
          %229 = sbr.rel (%p227) target = $region36
        $region35: #{tpu_custom_call.1} parent=27 // pred_region
          %v230 = vld [vmem:[#allocation2] sm:$0xff]
          %v231 = vld [vmem:[#allocation3] sm:$0xff]
          %v232 = vlog2.pop %v231
          %v233 = vmul.f32 %v232, 0.6931472
          %v234 = vadd.f32 %v230, %v233
          %v235 = vld [vmem:[#allocation4] sm:$0xff]
          %v236 = vsub.f32 %v234, %v235
          %vm237 = vcmp.ne.s32.totalorder %v188, 0
          %v238 = vsel %vm237, %v236, 0.0
          %v239 = vsel %vm203, %v238, 0.0
          %240 = vadd.xlane.f32.xlu0 %v239
          %v241 = vpop.xlane.xlu0 %240
          %v242 = vrot.slane %v241, 4
          %v243 = vadd.f32 %v241, %v242
          %v244 = vrot.slane %v243, 2
          %v245 = vadd.f32 %v243, %v244
          %v246 = vrot.slane %v245, 1
          %v247 = vadd.f32 %v245, %v246
          %s248 = vtos %v247
          %v249 = vsel %vm237, 1, 0
          %v250 = vcvt.s32.f32 %v249
          %v251 = vsel %vm203, %v250, 0.0
          %252 = vadd.xlane.f32.xlu0 %v251
          %v253 = vpop.xlane.xlu0 %252
          %v254 = vrot.slane %v253, 4
          %v255 = vadd.f32 %v253, %v254
          %v256 = vrot.slane %v255, 2
          %v257 = vadd.f32 %v255, %v256
          %v258 = vrot.slane %v257, 1
          %v259 = vadd.f32 %v257, %v258
          %s260 = vtos %v259
          %v261 = vlaneseq
          %v262 = vshrl.u32 %v261, 7
          %vm263 = vcmp.eq.s32.totalorder %v262, 0
          %vm264 = vcmp.eq.s32.totalorder %v190, 0
          %vm265 = vmand %vm263, %vm264
          %v266 = vstv %s248
          %v267 = vsel %vm265, %v266, 0.0
          %vm268 = vcmp.eq.s32.totalorder %v262, 1
          %vm269 = vmand %vm268, %vm264
          %v270 = vstv %s260
          %v271 = vsel %vm269, %v270, 0.0
          %v272 = vadd.f32 %v267, %v271
          %273 = vst [vmem:[%s167] sm:$0xff] %v272
        $region36: #{tpu_custom_call.1} parent=27 // pred_fallthru
          _
        %s274 = sand.u32 %s90, 1
        %s275 = scalar_lea.sflag [#allocation6], %s274
        %s276 = sand.u32 %s90, 1
        %s277 = smul.addr %s276, 8
        %s278 = scalar_lea.vmem [#allocation5], %s277
        // Predicated region
        $region37: #{tpu_custom_call.1} parent=27 // pred_check
          %p279 = pneg %p100
        $region38: #{tpu_custom_call.1} parent=27 // pred_check_branch
          %281 = sbr.rel (%p279) target = $region40
        $region39: #{tpu_custom_call.1} parent=27 // pred_region
          %283 = vsyncadd %s275, 0
          %s284 = smul.addr %s20, 8
          %s285 = scalar_lea.hbm %s2, %s284
          %s287 = sshll.u32 %s278, 4
          %s288 = int_to_ptr.vmem [resolvable:$true] %s287
          %s289 = sshll.u32 %s285, 4
          %s290 = int_to_ptr.hbm [resolvable:$true] %s289
          %292 = dma.vmem_to_hbm [thread:$0]  %s288, 128, %s290, %s275
        $region40: #{tpu_custom_call.1} parent=27 // pred_fallthru
          _
      $region28: #{tpu_custom_call.1} parent=5 // pred_fallthru
        _
      %p293 = scmp.le.s32.totalorder 2, %s11
      // Predicated region
      $region41: #{tpu_custom_call.1} parent=5 // pred_check
        %p294 = pneg %p293
      $region42: #{tpu_custom_call.1} parent=5 // pred_check_branch
        %296 = sbr.rel (%p294) target = $region44
      $region43: #{tpu_custom_call.1} parent=5 // pred_region
        %s297 = ssub.s32 %s11, 2
        // Predicated region
        $region45: #{tpu_custom_call.1} parent=43 // pred_check
          %p298 = pneg %p106
        $region46: #{tpu_custom_call.1} parent=43 // pred_check_branch
          %300 = sbr.rel (%p298) target = $region48
        $region47: #{tpu_custom_call.1} parent=43 // pred_region
          %s301 = sand.u32 %s91, 1
          %s302 = scalar_lea.sflag [#allocation6], %s301
          %s303 = sand.u32 %s91, 1
          %s304 = smul.addr %s303, 8
          %s305 = scalar_lea.vmem [#allocation5], %s304
          %307 = dma.done %s302, 128
        $region48: #{tpu_custom_call.1} parent=43 // pred_fallthru
          _
      $region44: #{tpu_custom_call.1} parent=5 // pred_fallthru
        _
    $region6: #{tpu_custom_call.1} parent=1 // loop_footer
      %s15 = sadd.s32 1, %s11
    $region7: #{tpu_custom_call.1} parent=1 // loop_footer_branch
      %10 = sbr.rel target = $region3
    $region8: #{tpu_custom_call.1} parent=1 // loop_exit
      _
    %308 = vsyncpa [#allocation6], 1
    %s309 = scalar_lea.sflag [#allocation6], 1
    %310 = vsyncpa %s309, 1

</llo_original>
